<compile_context>
chip_gen: v5e
topology: v5e:2x2
jax: 0.10.0
libtpu: 0.0.40
codegen_flags: <defaults>
</compile_context>

<pallas_src>
import functools

import jax
import jax.numpy as jnp
from jax import lax
from jax.experimental import pallas as pl
from jax.experimental.pallas import tpu as pltpu


def _round_up(x, m):
    return ((x + m - 1) // m) * m


def _focal_loss_kernel(logits_ref, target_ref, out_ref, *,
                       gamma, n_valid, tile_n, tiles_per_split):
    """Processes one (tile_n, C) batch slab; accumulates a partial focal sum."""
    split = pl.program_id(0)   # parallel axis (megacore shard)
    step = pl.program_id(1)    # batch-reduction axis ("arbitrary")

    @pl.when(step == 0)
    def _():
        out_ref[...] = jnp.zeros_like(out_ref)

    x = logits_ref[...].astype(jnp.float32)      # (tile_n, C), f32 math
    tgt = target_ref[...]                        # (tile_n, 1) int32
    tn, c = x.shape

    # One-hot of the target class via iota compare (MXU is useless here).
    col_ids = lax.broadcasted_iota(jnp.int32, (tn, c), 1)
    onehot = col_ids == tgt

    # Numerically stable log-softmax cross entropy per row.
    m = jnp.max(x, axis=1, keepdims=True)                                # (tn, 1)
    lse = m + jnp.log(jnp.sum(jnp.exp(x - m), axis=1, keepdims=True))    # (tn, 1)
    picked = jnp.sum(jnp.where(onehot, x, 0.0), axis=1, keepdims=True)   # (tn, 1)
    ce = jnp.maximum(lse - picked, 0.0)          # clamp tiny negative rounding

    # Focal reweighting. Integer gamma -> pure VPU multiplies (no EUP pow).
    pt = jnp.exp(-ce)
    base = jnp.maximum(1.0 - pt, 0.0)
    if isinstance(gamma, int):
        w = lax.integer_pow(base, gamma)
    else:
        w = base ** jnp.float32(gamma)
    focal = w * ce                               # (tn, 1)

    # Mask out batch-padding rows.
    row0 = (split * tiles_per_split + step) * tile_n
    row_ids = row0 + lax.broadcasted_iota(jnp.int32, (tn, 1), 0)
    focal = jnp.where(row_ids < n_valid, focal, 0.0)

    # Accumulate into the per-split resident output block.
    out_ref[...] += jnp.sum(focal)


def focal_loss(logits, target, gamma=2, *, tile_n=2048, num_splits=2):
    """Pallas TPU implementation of FocalLoss(gamma).forward(logits, target)."""
    n, c = logits.shape

    # Tile sizing: multiple of 8 sublanes, capped at the (rounded-up) batch.
    tile_n = max(8, min(_round_up(tile_n, 8), _round_up(n, 8)))
    tiles_total = pl.cdiv(n, tile_n)
    num_splits = max(1, min(num_splits, tiles_total))
    tiles_per_split = pl.cdiv(tiles_total, num_splits)
    padded_n = num_splits * tiles_per_split * tile_n

    # Keep logits in their native dtype (bf16 stays bf16 on the DMA).
    pad_rows = padded_n - n
    target_i32 = target.astype(jnp.int32)
    if pad_rows:
        logits_p = jnp.pad(logits, ((0, pad_rows), (0, 0)))
        target_i32 = jnp.pad(target_i32, ((0, pad_rows),))
    else:
        logits_p = logits
    target2d = target_i32.reshape(padded_n, 1)

    kernel = functools.partial(
        _focal_loss_kernel,
        gamma=gamma,
        n_valid=n,
        tile_n=tile_n,
        tiles_per_split=tiles_per_split,
    )

    partials = pl.pallas_call(
        kernel,
        out_shape=jax.ShapeDtypeStruct((num_splits, 1, 1), jnp.float32),
        grid=(num_splits, tiles_per_split),
        in_specs=[
            pl.BlockSpec((tile_n, c),
                         lambda s, i: (s * tiles_per_split + i, 0)),
            pl.BlockSpec((tile_n, 1),
                         lambda s, i: (s * tiles_per_split + i, 0)),
        ],
        out_specs=pl.BlockSpec((1, 1, 1), lambda s, i: (s, 0, 0)),
        compiler_params=pltpu.CompilerParams(
            dimension_semantics=("parallel", "arbitrary")),
    )(logits_p, target2d)

    # Reduce the per-split partial sums and take the batch mean.
    return jnp.sum(partials[:, 0, 0]) / jnp.float32(n)


def focal_loss_ref(logits, target, gamma=2):
    """Pure-JAX reference (mirrors F.cross_entropy + focal weighting)."""
    x = logits.astype(jnp.float32)
    lse = jax.scipy.special.logsumexp(x, axis=1)
    picked = jnp.take_along_axis(x, target[:, None].astype(jnp.int32), axis=1)[:, 0]
    ce = lse - picked
    pt = jnp.exp(-ce)
    return jnp.mean((1.0 - pt) ** gamma * ce)


if __name__ == "__main__":
    key = jax.random.PRNGKey(0)
    k_logits, k_target = jax.random.split(key)

    # Small but non-trivial: batch not a multiple of the tile (exercises the
    # padding mask), multiple grid steps, and both grid axes.
    N, C = 120, 16
    logits = jax.random.normal(k_logits, (N, C), dtype=jnp.float32)
    target = jax.random.randint(k_target, (N,), 0, C, dtype=jnp.int32)

    loss = focal_loss(logits, target, gamma=2, tile_n=32, num_splits=2)
    jax.block_until_ready(loss)

    ref = focal_loss_ref(logits, target, gamma=2)
    assert jnp.allclose(loss, ref, rtol=1e-5, atol=1e-6), (loss, ref)

    print("KERNEL_OK")
</pallas_src>

<mosaic_0001>
module attributes {stable_mosaic.version = 11 : i64} {
  func.func @_focal_loss_kernel(%arg0: i32, %arg1: i32, %arg2: memref<32x16xf32, #tpu.memory_space<vmem>>, %arg3: memref<32x1xi32, #tpu.memory_space<vmem>>, %arg4: memref<1x1x1xf32, #tpu.memory_space<vmem>>) attributes {dimension_semantics = [#tpu.dimension_semantics<parallel>, #tpu.dimension_semantics<arbitrary>], iteration_bounds = array<i64: 2, 2>, scalar_prefetch = 0 : i64, scratch_operands = 0 : i64, tpu.core_type = #tpu.core_type<tc>, window_params = [{transform_indices = @transform_0, window_bounds = array<i64: 32, 16>}, {transform_indices = @transform_1, window_bounds = array<i64: 32, 1>}, {transform_indices = @transform_2, window_bounds = array<i64: 1, 1, 1>}]} {
    %c0_i32 = arith.constant 0 : i32
    %0 = arith.cmpi eq, %arg1, %c0_i32 : i32
    %1 = arith.extui %0 : i1 to i32
    %c0_i32_0 = arith.constant 0 : i32
    %2 = arith.cmpi ne, %1, %c0_i32_0 : i32
    scf.if %2 {
      %cst_19 = arith.constant 0.000000e+00 : f32
      %51 = vector.broadcast %cst_19 : f32 to vector<1x1x1xf32>
      %c0_20 = arith.constant 0 : index
      %c0_21 = arith.constant 0 : index
      %c0_22 = arith.constant 0 : index
      %52 = vector.load %arg4[%c0_20, %c0_21, %c0_22] : memref<1x1x1xf32, #tpu.memory_space<vmem>>, vector<1x1x1xf32>
      tpu.vector_store %arg4[%c0_20, %c0_21, %c0_22], %51 {strides = array<i32>} : memref<1x1x1xf32, #tpu.memory_space<vmem>>, vector<1x1x1xf32>,
    } else {
    }
    %c0 = arith.constant 0 : index
    %c0_1 = arith.constant 0 : index
    %3 = vector.load %arg2[%c0, %c0_1] : memref<32x16xf32, #tpu.memory_space<vmem>>, vector<32x16xf32>
    %c0_2 = arith.constant 0 : index
    %c0_3 = arith.constant 0 : index
    %4 = vector.load %arg3[%c0_2, %c0_3] : memref<32x1xi32, #tpu.memory_space<vmem>>, vector<32x1xi32>
    %5 = tpu.iota {dimensions = array<i32: 1>} : vector<32x16xi32>
    %6 = vector.broadcast %4 : vector<32x1xi32> to vector<32x16xi32>
    %7 = arith.cmpi eq, %5, %6 : vector<32x16xi32>
    %cst = arith.constant dense<0xFF800000> : vector<32xf32>
    %8 = vector.multi_reduction <maximumf>, %3, %cst [1] : vector<32x16xf32> to vector<32xf32>
    %9 = vector.shape_cast %8 : vector<32xf32> to vector<32x1xf32>
    %10 = vector.broadcast %9 : vector<32x1xf32> to vector<32x16xf32>
    %11 = arith.subf %3, %10 : vector<32x16xf32>
    %12 = math.exp %11 : vector<32x16xf32>
    %cst_4 = arith.constant dense<0.000000e+00> : vector<32xf32>
    %13 = vector.multi_reduction <add>, %12, %cst_4 [1] : vector<32x16xf32> to vector<32xf32>
    %14 = vector.shape_cast %13 : vector<32xf32> to vector<32x1xf32>
    %15 = math.log %14 : vector<32x1xf32>
    %16 = arith.addf %9, %15 : vector<32x1xf32>
    %cst_5 = arith.constant 0.000000e+00 : f32
    %17 = vector.broadcast %cst_5 : f32 to vector<32x16xf32>
    %18 = arith.select %7, %3, %17 : vector<32x16xi1>, vector<32x16xf32>
    %cst_6 = arith.constant dense<0.000000e+00> : vector<32xf32>
    %19 = vector.multi_reduction <add>, %18, %cst_6 [1] : vector<32x16xf32> to vector<32xf32>
    %20 = vector.shape_cast %19 : vector<32xf32> to vector<32x1xf32>
    %21 = arith.subf %16, %20 : vector<32x1xf32>
    %cst_7 = arith.constant 0.000000e+00 : f32
    %22 = vector.broadcast %cst_7 : f32 to vector<32x1xf32>
    %23 = arith.maximumf %21, %22 : vector<32x1xf32>
    %cst_8 = arith.constant 0.000000e+00 : f32
    %24 = vector.broadcast %cst_8 : f32 to vector<32x1xf32>
    %25 = arith.subf %24, %23 : vector<32x1xf32>
    %26 = math.exp %25 : vector<32x1xf32>
    %cst_9 = arith.constant 1.000000e+00 : f32
    %27 = vector.broadcast %cst_9 : f32 to vector<32x1xf32>
    %28 = arith.subf %27, %26 : vector<32x1xf32>
    %cst_10 = arith.constant 0.000000e+00 : f32
    %29 = vector.broadcast %cst_10 : f32 to vector<32x1xf32>
    %30 = arith.maximumf %28, %29 : vector<32x1xf32>
    %31 = arith.mulf %30, %30 : vector<32x1xf32>
    %32 = arith.mulf %31, %23 : vector<32x1xf32>
    %c2_i32 = arith.constant 2 : i32
    %33 = arith.muli %arg0, %c2_i32 : i32
    %34 = arith.addi %33, %arg1 : i32
    %c32_i32 = arith.constant 32 : i32
    %35 = arith.muli %34, %c32_i32 : i32
    %36 = tpu.iota {dimensions = array<i32: 0>} : vector<32x1xi32>
    %37 = vector.broadcast %35 : i32 to vector<32x1xi32>
    %38 = arith.addi %37, %36 : vector<32x1xi32>
    %c120_i32 = arith.constant 120 : i32
    %39 = vector.broadcast %c120_i32 : i32 to vector<32x1xi32>
    %40 = arith.cmpi slt, %38, %39 : vector<32x1xi32>
    %cst_11 = arith.constant 0.000000e+00 : f32
    %41 = vector.broadcast %cst_11 : f32 to vector<32x1xf32>
    %42 = arith.select %40, %32, %41 : vector<32x1xi1>, vector<32x1xf32>
    %c0_12 = arith.constant 0 : index
    %c0_13 = arith.constant 0 : index
    %c0_14 = arith.constant 0 : index
    %43 = vector.load %arg4[%c0_12, %c0_13, %c0_14] : memref<1x1x1xf32, #tpu.memory_space<vmem>>, vector<1x1x1xf32>
    %44 = vector.shape_cast %42 : vector<32x1xf32> to vector<1x32x1xf32>
    %cst_15 = arith.constant dense<0.000000e+00> : vector<1xf32>
    %45 = vector.multi_reduction <add>, %44, %cst_15 [1, 2] : vector<1x32x1xf32> to vector<1xf32>
    %46 = vector.shape_cast %45 : vector<1xf32> to vector<1x1x1xf32>
    %47 = vector.extract %46[0, 0, 0] : f32 from vector<1x1x1xf32>
    %48 = vector.broadcast %47 : f32 to vector<1x1x1xf32>
    %49 = arith.addf %43, %48 : vector<1x1x1xf32>
    %c0_16 = arith.constant 0 : index
    %c0_17 = arith.constant 0 : index
    %c0_18 = arith.constant 0 : index
    %50 = vector.load %arg4[%c0_16, %c0_17, %c0_18] : memref<1x1x1xf32, #tpu.memory_space<vmem>>, vector<1x1x1xf32>
    tpu.vector_store %arg4[%c0_16, %c0_17, %c0_18], %49 {strides = array<i32>} : memref<1x1x1xf32, #tpu.memory_space<vmem>>, vector<1x1x1xf32>,
    return
  }
  func.func @transform_0(%arg0: i32, %arg1: i32) -> (i32, i32) {
    %c2_i32 = arith.constant 2 : i32
    %0 = arith.muli %arg0, %c2_i32 : i32
    %1 = arith.addi %0, %arg1 : i32
    %c0_i32 = arith.constant 0 : i32
    %c0_i32_0 = arith.constant 0 : i32
    return %1, %c0_i32 : i32, i32
  }
  func.func @transform_1(%arg0: i32, %arg1: i32) -> (i32, i32) {
    %c2_i32 = arith.constant 2 : i32
    %0 = arith.muli %arg0, %c2_i32 : i32
    %1 = arith.addi %0, %arg1 : i32
    %c0_i32 = arith.constant 0 : i32
    %c0_i32_0 = arith.constant 0 : i32
    return %1, %c0_i32 : i32, i32
  }
  func.func @transform_2(%arg0: i32, %arg1: i32) -> (i32, i32, i32) {
    %c0_i32 = arith.constant 0 : i32
    %c0_i32_0 = arith.constant 0 : i32
    %c0_i32_1 = arith.constant 0 : i32
    return %arg0, %c0_i32, %c0_i32_0 : i32, i32, i32
  }
}

</mosaic_0001>

<llo_original>
// kernel: tpu_custom_call.1
$region0: #{tpu_custom_call.1}
  #allocation0 [shape = 'u32[]', space=smem, size = 0x4, offset = 0x4, fixed_abs, tag = 'smem constant byte address 0x4 - core index']
  #allocation1 [shape = 'u32[72,128]{1,0:T(1,128)}', space=vmem, size = 0x9000, scoped, tag = 'internal scratch']
  %s0 = inlined_call_operand.vmem [shape: f32[128,16], index: 0, kind: input, shape index: {}]
  %s1 = inlined_call_operand.vmem [shape: s32[128,1], index: 1, kind: input, shape index: {}]
  %s2 = inlined_call_operand.vmem [shape: f32[2,1,1], index: 2, kind: output, shape index: {}]
  %s3 = sld [smem:[#allocation0]]
  $region45: #{tpu_custom_call.1} parent=0
    _
  %s5 = ssub.s32 1, %s3
  %s6 = scalar_select 0, %s5, %s3
  loop: start=0, step=1, limit=6
  $region2: #{tpu_custom_call.1} parent=0 // loop_pre_header
    _
  $region3: #{tpu_custom_call.1} parent=0 // loop_header
    %s8 = sphi 0, %s12
    %p9 = scmp.ge.s32.totalorder %s8, 6
    %s15 = sphi 0, %s27
    %s16 = sphi 0, %s23
    %s17 = sphi 0, %s15
    %s18 = sphi 0, %s16
    %s19 = sphi 0, %s17
    %s20 = sphi 0, %s18
    %s34 = sphi 0, %s36
    %s37 = sphi 0, %s34
    %s38 = sphi 0, %s37
    %s54 = sphi 0, %s38
    %s64 = sphi 0, %s66
    %s67 = sphi 0, %s64
    %s68 = sphi 0, %s67
    %s84 = sphi 0, %s68
    %s90 = sphi 0, %s92
    %s93 = sphi 0, %s90
    %s94 = sphi 0, %s93
    %s110 = sphi 0, %s94
  $region4: #{tpu_custom_call.1} parent=0 // loop_header_branch
    %11 = sbr.rel (%p9) target = $region8
  $region5: #{tpu_custom_call.1} parent=0 // loop_body
    %s13 = ssub.s32 %s8, 1
    %s14 = ssub.s32 %s8, 2
    %s21 = sadd.s32 1, %s16
    %p22 = scmp.ge.s32.totalorder %s21, 2
    %s23 = scalar_select %p22, 0, %s21
    %s24 = sadd.s32 1, %s15
    %s25 = scalar_select %p22, %s24, %s15
    %p26 = scmp.ge.s32.totalorder %s25, 2
    %s27 = scalar_select %p26, 0, %s25
    %s28 = smul.u32 %s15, 2
    %s29 = sadd.s32 %s28, %s16
    %s30 = smul.u32 %s27, 2
    %s31 = sadd.s32 %s30, %s23
    %s32 = ssub.s32 %s29, %s31
    %p33 = scmp.eq.s32.totalorder %s32, 0
    %s35 = sadd.s32 %s34, 1
    %s36 = scalar_select %p33, %s34, %s35
    %p39 = pneg %p33
    %p40 = scmp.eq.s32.totalorder %s8, 3
    %p41 = por %p39, %p40
    %p42 = scmp.ne.s32.totalorder %s34, %s37
    %p43 = scmp.eq.s32.totalorder %s8, 0
    %p44 = por %p42, %p43
    %p45 = scmp.ne.s32.totalorder %s34, %s37
    %p46 = scmp.eq.s32.totalorder %s13, 3
    %p47 = por %p45, %p46
    %p48 = scmp.ne.s32.totalorder %s37, %s38
    %p49 = scmp.eq.s32.totalorder %s13, 0
    %p50 = por %p48, %p49
    %p51 = scmp.ne.s32.totalorder %s37, %s38
    %p52 = scmp.eq.s32.totalorder %s14, 3
    %p53 = por %p51, %p52
    %p55 = scmp.ne.s32.totalorder %s38, %s54
    %p56 = scmp.eq.s32.totalorder %s14, 0
    %p57 = por %p55, %p56
    %s58 = smul.u32 %s15, 2
    %s59 = sadd.s32 %s58, %s16
    %s60 = smul.u32 %s27, 2
    %s61 = sadd.s32 %s60, %s23
    %s62 = ssub.s32 %s59, %s61
    %p63 = scmp.eq.s32.totalorder %s62, 0
    %s65 = sadd.s32 %s64, 1
    %s66 = scalar_select %p63, %s64, %s65
    %p69 = pneg %p63
    %p70 = scmp.eq.s32.totalorder %s8, 3
    %p71 = por %p69, %p70
    %p72 = scmp.ne.s32.totalorder %s64, %s67
    %p73 = scmp.eq.s32.totalorder %s8, 0
    %p74 = por %p72, %p73
    %p75 = scmp.ne.s32.totalorder %s64, %s67
    %p76 = scmp.eq.s32.totalorder %s13, 3
    %p77 = por %p75, %p76
    %p78 = scmp.ne.s32.totalorder %s67, %s68
    %p79 = scmp.eq.s32.totalorder %s13, 0
    %p80 = por %p78, %p79
    %p81 = scmp.ne.s32.totalorder %s67, %s68
    %p82 = scmp.eq.s32.totalorder %s14, 3
    %p83 = por %p81, %p82
    %p85 = scmp.ne.s32.totalorder %s68, %s84
    %p86 = scmp.eq.s32.totalorder %s14, 0
    %p87 = por %p85, %p86
    %s88 = ssub.s32 %s15, %s27
    %p89 = scmp.eq.s32.totalorder %s88, 0
    %s91 = sadd.s32 %s90, 1
    %s92 = scalar_select %p89, %s90, %s91
    %p95 = pneg %p89
    %p96 = scmp.eq.s32.totalorder %s8, 3
    %p97 = por %p95, %p96
    %p98 = scmp.ne.s32.totalorder %s90, %s93
    %p99 = scmp.eq.s32.totalorder %s8, 0
    %p100 = por %p98, %p99
    %p101 = scmp.ne.s32.totalorder %s90, %s93
    %p102 = scmp.eq.s32.totalorder %s13, 3
    %p103 = por %p101, %p102
    %p104 = scmp.ne.s32.totalorder %s93, %s94
    %p105 = scmp.eq.s32.totalorder %s13, 0
    %p106 = por %p104, %p105
    %p107 = scmp.ne.s32.totalorder %s93, %s94
    %p108 = scmp.eq.s32.totalorder %s14, 3
    %p109 = por %p107, %p108
    %p111 = scmp.ne.s32.totalorder %s94, %s110
    %p112 = scmp.eq.s32.totalorder %s14, 0
    %p113 = por %p111, %p112
    %p114 = scmp.le.s32.totalorder 1, %s8
    %p115 = scmp.lt.s32.totalorder %s8, 5
    %p116 = pnand %p114, %p115
    %p117 = pneg %p116
    // Predicated region
    $region9: #{tpu_custom_call.1} parent=5 // pred_check
      _
    $region10: #{tpu_custom_call.1} parent=5 // pred_check_branch
      %119 = sbr.rel (%p116) target = $region12
    $region11: #{tpu_custom_call.1} parent=5 // pred_region
      %s120 = ssub.s32 %s8, 1
    $region12: #{tpu_custom_call.1} parent=5 // pred_fallthru
      _
    %p121 = scmp.lt.s32.totalorder %s8, 4
    // Predicated region
    $region13: #{tpu_custom_call.1} parent=5 // pred_check
      %p122 = pneg %p121
    $region14: #{tpu_custom_call.1} parent=5 // pred_check_branch
      %124 = sbr.rel (%p122) target = $region16
    $region15: #{tpu_custom_call.1} parent=5 // pred_region
      // Predicated region
      $region17: #{tpu_custom_call.1} parent=15 // pred_check
        %p125 = pneg %p44
      $region18: #{tpu_custom_call.1} parent=15 // pred_check_branch
        %127 = sbr.rel (%p125) target = $region20
      $region19: #{tpu_custom_call.1} parent=15 // pred_region
        %s128 = smul.u32 %s15, 2
        %s129 = sadd.s32 %s128, %s16
        %s130 = smul.u32 4, %s129
        %p131 = scmp.lt.s32.totalorder %s130, 15
        %s132 = scalar_select %p131, %s130, 15
        %s133 = smul.addr %s132, 8
        %s134 = scalar_lea.vmem %s0, %s133
        %s135 = smul.u32 %s15, 2
        %s136 = sadd.s32 %s135, %s16
        %s137 = smul.u32 4, %s136
      $region20: #{tpu_custom_call.1} parent=15 // pred_fallthru
        _
      // Predicated region
      $region21: #{tpu_custom_call.1} parent=15 // pred_check
        %p138 = pneg %p74
      $region22: #{tpu_custom_call.1} parent=15 // pred_check_branch
        %140 = sbr.rel (%p138) target = $region24
      $region23: #{tpu_custom_call.1} parent=15 // pred_region
        %s141 = smul.u32 %s15, 2
        %s142 = sadd.s32 %s141, %s16
        %s143 = smul.u32 4, %s142
        %p144 = scmp.lt.s32.totalorder %s143, 15
        %s145 = scalar_select %p144, %s143, 15
        %s146 = smul.addr %s145, 8
        %s147 = scalar_lea.vmem %s1, %s146
        %s148 = smul.u32 %s15, 2
        %s149 = sadd.s32 %s148, %s16
        %s150 = smul.u32 4, %s149
      $region24: #{tpu_custom_call.1} parent=15 // pred_fallthru
        _
    $region16: #{tpu_custom_call.1} parent=5 // pred_fallthru
      _
    %p151 = scmp.le.s32.totalorder 1, %s8
    %p152 = scmp.lt.s32.totalorder %s8, 5
    %p153 = pnand %p151, %p152
    %p154 = pneg %p153
    // Predicated region
    $region25: #{tpu_custom_call.1} parent=5 // pred_check
      _
    $region26: #{tpu_custom_call.1} parent=5 // pred_check_branch
      %156 = sbr.rel (%p153) target = $region28
    $region27: #{tpu_custom_call.1} parent=5 // pred_region
      %s157 = ssub.s32 %s8, 1
      %s158 = smul.u32 %s17, 2
      %s159 = sadd.s32 %s158, %s18
      %s160 = smul.u32 4, %s159
      %p161 = scmp.lt.s32.totalorder %s160, 15
      %s162 = scalar_select %p161, %s160, 15
      %s163 = smul.addr %s162, 8
      %s164 = scalar_lea.vmem %s0, %s163
      %p165 = pneg %p50
      %p166 = pneg %p47
      %s167 = smul.u32 %s17, 2
      %s168 = sadd.s32 %s167, %s18
      %s169 = smul.u32 4, %s168
      %p170 = scmp.lt.s32.totalorder %s169, 15
      %s171 = scalar_select %p170, %s169, 15
      %s172 = smul.addr %s171, 8
      %s173 = scalar_lea.vmem %s1, %s172
      %p174 = pneg %p80
      %p175 = pneg %p77
      %p176 = pneg %p106
      %p177 = pneg %p103
      %p178 = scmp.lt.s32.totalorder %s17, 1
      %s179 = scalar_select %p178, %s17, 1
      %s180 = scalar_lea.vmem %s2, %s179
      %s181 = smul.u32 %s17, 2
      %s182 = sadd.s32 %s181, %s18
      %s183 = smul.u32 4, %s182
      %p184 = scmp.lt.s32.totalorder %s183, 15
      %s185 = scalar_select %p184, %s183, 15
      %s186 = smul.addr %s185, 8
      %s187 = scalar_lea.vmem %s0, %s186
      %s188 = smul.u32 %s17, 2
      %s189 = sadd.s32 %s188, %s18
      %s190 = smul.u32 4, %s189
      %s191 = smul.u32 %s17, 2
      %s192 = sadd.s32 %s191, %s18
      %s193 = smul.u32 4, %s192
      %p194 = scmp.lt.s32.totalorder %s193, 15
      %s195 = scalar_select %p194, %s193, 15
      %s196 = smul.addr %s195, 8
      %s197 = scalar_lea.vmem %s1, %s196
      %s198 = smul.u32 %s17, 2
      %s199 = sadd.s32 %s198, %s18
      %s200 = smul.u32 4, %s199
      %p201 = scmp.lt.s32.totalorder %s17, 1
      %s202 = scalar_select %p201, %s17, 1
      %s203 = scalar_lea.vmem %s2, %s202
      %p204 = scmp.eq.s32.totalorder %s18, 0
      // Predicated region
      $region29: #{tpu_custom_call.1} parent=27 // pred_check
        %p205 = pneg %p204
      $region30: #{tpu_custom_call.1} parent=27 // pred_check_branch
        %207 = sbr.rel (%p205) target = $region32
      $region31: #{tpu_custom_call.1} parent=27 // pred_region
        %vm208 = vcmask 0
        %209 = vst.msk [vmem:[%s203] sm:$0x1] %vm208, 0.0
      $region32: #{tpu_custom_call.1} parent=27 // pred_fallthru
        _
      %v210 = vld [vmem:[%s187] sm:$0xff]
      %v211 = vld [vmem:[%s187 + $0x8] sm:$0xff]
      %v212 = vld [vmem:[%s187 + $0x10] sm:$0xff]
      %v213 = vld [vmem:[%s187 + $0x18] sm:$0xff]
      %v214 = vld [vmem:[%s197] sm:$0xff]
      %v215 = vld [vmem:[%s197 + $0x8] sm:$0xff]
      %v216 = vld [vmem:[%s197 + $0x10] sm:$0xff]
      %v217 = vld [vmem:[%s197 + $0x18] sm:$0xff]
      %v218 = vlaneseq
      %v219 = vand.u32 %v218, 127
      %220 = vset.pattern.permute.xlu0 0
      %221 = vperm.xlu0 %220, %v214
      %v222 = vpop.permute.xlu0 %221
      %223 = vset.pattern.permute.xlu0 0
      %224 = vperm.xlu0 %223, %v215
      %v225 = vpop.permute.xlu0 %224
      %226 = vset.pattern.permute.xlu0 0
      %227 = vperm.xlu0 %226, %v216
      %v228 = vpop.permute.xlu0 %227
      %229 = vset.pattern.permute.xlu0 0
      %230 = vperm.xlu0 %229, %v217
      %v231 = vpop.permute.xlu0 %230
      %vm232 = vcmp.eq.s32.totalorder %v219, %v222
      %vm233 = vcmp.eq.s32.totalorder %v219, %v225
      %vm234 = vcmp.eq.s32.totalorder %v219, %v228
      %vm235 = vcmp.eq.s32.totalorder %v219, %v231
      %vm236 = vcmask 130048
      %v237 = vsel %vm236, %v210, -inf
      %238 = vmax.xlane.f32.xlu0 %v237
      %v239 = vpop.xlane.xlu0 %238
      %v240 = vsel %vm236, %v211, -inf
      %241 = vmax.xlane.f32.xlu0 %v240
      %v242 = vpop.xlane.xlu0 %241
      %v243 = vsel %vm236, %v212, -inf
      %244 = vmax.xlane.f32.xlu0 %v243
      %v245 = vpop.xlane.xlu0 %244
      %v246 = vsel %vm236, %v213, -inf
      %247 = vmax.xlane.f32.xlu0 %v246
      %v248 = vpop.xlane.xlu0 %247
      %v249 = vsub.f32 %v210, %v239
      %v250 = vsub.f32 %v211, %v242
      %v251 = vsub.f32 %v212, %v245
      %v252 = vsub.f32 %v213, %v248
      %v253 = vmul.f32 %v249, 1.442695
      %v254 = vpow.pop %v253
      %v255 = vmul.f32 %v250, 1.442695
      %v256 = vpow.pop %v255
      %v257 = vmul.f32 %v251, 1.442695
      %v258 = vpow.pop %v257
      %v259 = vmul.f32 %v252, 1.442695
      %v260 = vpow.pop %v259
      %v261 = vsel %vm236, %v254, 0.0
      %262 = vadd.xlane.f32.xlu0 %v261
      %v263 = vpop.xlane.xlu0 %262
      %v264 = vsel %vm236, %v256, 0.0
      %265 = vadd.xlane.f32.xlu0 %v264
      %v266 = vpop.xlane.xlu0 %265
      %v267 = vsel %vm236, %v258, 0.0
      %268 = vadd.xlane.f32.xlu0 %v267
      %v269 = vpop.xlane.xlu0 %268
      %v270 = vsel %vm236, %v260, 0.0
      %271 = vadd.xlane.f32.xlu0 %v270
      %v272 = vpop.xlane.xlu0 %271
      %v273 = vlog2.pop %v263
      %v274 = vmul.f32 %v273, 0.6931472
      %v275 = vlog2.pop %v266
      %v276 = vmul.f32 %v275, 0.6931472
      %v277 = vlog2.pop %v269
      %v278 = vmul.f32 %v277, 0.6931472
      %v279 = vlog2.pop %v272
      %v280 = vmul.f32 %v279, 0.6931472
      %v281 = vadd.f32 %v239, %v274
      %v282 = vadd.f32 %v242, %v276
      %v283 = vadd.f32 %v245, %v278
      %v284 = vadd.f32 %v248, %v280
      %v285 = vsel %vm232, %v210, 0.0
      %v286 = vsel %vm233, %v211, 0.0
      %v287 = vsel %vm234, %v212, 0.0
      %v288 = vsel %vm235, %v213, 0.0
      %v289 = vsel %vm236, %v285, 0.0
      %290 = vadd.xlane.f32.xlu0 %v289
      %v291 = vpop.xlane.xlu0 %290
      %v292 = vsel %vm236, %v286, 0.0
      %293 = vadd.xlane.f32.xlu0 %v292
      %v294 = vpop.xlane.xlu0 %293
      %v295 = vsel %vm236, %v287, 0.0
      %296 = vadd.xlane.f32.xlu0 %v295
      %v297 = vpop.xlane.xlu0 %296
      %v298 = vsel %vm236, %v288, 0.0
      %299 = vadd.xlane.f32.xlu0 %v298
      %v300 = vpop.xlane.xlu0 %299
      %v301 = vsub.f32 %v281, %v291
      %v302 = vsub.f32 %v282, %v294
      %v303 = vsub.f32 %v283, %v297
      %v304 = vsub.f32 %v284, %v300
      %v305 = vmax.f32 %v301, 0.0
      %v306 = vmax.f32 %v302, 0.0
      %v307 = vmax.f32 %v303, 0.0
      %v308 = vmax.f32 %v304, 0.0
      %v309 = vsub.f32 0.0, %v305
      %v310 = vsub.f32 0.0, %v306
      %v311 = vsub.f32 0.0, %v307
      %v312 = vsub.f32 0.0, %v308
      %v313 = vmul.f32 %v309, 1.442695
      %v314 = vpow.pop %v313
      %v315 = vmul.f32 %v310, 1.442695
      %v316 = vpow.pop %v315
      %v317 = vmul.f32 %v311, 1.442695
      %v318 = vpow.pop %v317
      %v319 = vmul.f32 %v312, 1.442695
      %v320 = vpow.pop %v319
      %v321 = vsub.f32 1.0, %v314
      %v322 = vsub.f32 1.0, %v316
      %v323 = vsub.f32 1.0, %v318
      %v324 = vsub.f32 1.0, %v320
      %v325 = vmax.f32 %v321, 0.0
      %v326 = vmax.f32 %v322, 0.0
      %v327 = vmax.f32 %v323, 0.0
      %v328 = vmax.f32 %v324, 0.0
      %v329 = vmul.f32 %v325, %v325
      %v330 = vmul.f32 %v326, %v326
      %v331 = vmul.f32 %v327, %v327
      %v332 = vmul.f32 %v328, %v328
      %v333 = vmul.f32 %v329, %v305
      %v334 = vmul.f32 %v330, %v306
      %v335 = vmul.f32 %v331, %v307
      %v336 = vmul.f32 %v332, %v308
      %s337 = smul.u32 %s17, 2
      %s338 = sadd.s32 %s337, %s18
      %s339 = smul.u32 %s338, 32
      %v340 = vlaneseq
      %v341 = vshrl.u32 %v340, 7
      %v342 = vadd.s32 %v341, 8
      %v343 = vadd.s32 %v341, 16
      %v344 = vadd.s32 %v341, 24
      %v345 = vstv %s339
      %v346 = vadd.s32 %v345, %v341
      %v347 = vadd.s32 %v345, %v342
      %v348 = vadd.s32 %v345, %v343
      %v349 = vadd.s32 %v345, %v344
      %vm350 = vcmp.lt.s32.totalorder %v346, 120
      %vm351 = vcmp.lt.s32.totalorder %v347, 120
      %vm352 = vcmp.lt.s32.totalorder %v348, 120
      %vm353 = vcmp.lt.s32.totalorder %v349, 120
      %v354 = vsel %vm350, %v333, 0.0
      %v355 = vsel %vm351, %v334, 0.0
      %v356 = vsel %vm352, %v335, 0.0
      %v357 = vsel %vm353, %v336, 0.0
      %v358 = vld [vmem:[%s203] sm:$0x1]
      %vm359 = vcmask 7168
      %v360 = vsel %vm359, %v354, 0.0
      %v361 = vsel %vm359, %v355, 0.0
      %v362 = vadd.f32 %v360, %v361
      %v363 = vsel %vm359, %v356, 0.0
      %v364 = vadd.f32 %v362, %v363
      %v365 = vsel %vm359, %v357, 0.0
      %v366 = vadd.f32 %v364, %v365
      %367 = vadd.xlane.f32.xlu0 %v366
      %v368 = vpop.xlane.xlu0 %367
      %v369 = vrot.slane %v368, 4
      %v370 = vadd.f32 %v368, %v369
      %v371 = vrot.slane %v370, 2
      %v372 = vadd.f32 %v370, %v371
      %v373 = vrot.slane %v372, 1
      %v374 = vadd.f32 %v372, %v373
      %s375 = vtos %v374
      %v376 = vstv %s375
      %v377 = vadd.f32 %v358, %v376
      %vm378 = vcmask 0
      %379 = vst.msk [vmem:[%s203] sm:$0x1] %vm378, %v377
      %p380 = scmp.lt.s32.totalorder %s17, 1
      %s381 = scalar_select %p380, %s17, 1
      %s382 = scalar_lea.vmem %s2, %s381
      // Predicated region
      $region33: #{tpu_custom_call.1} parent=27 // pred_check
        %p383 = pneg %p103
      $region34: #{tpu_custom_call.1} parent=27 // pred_check_branch
        %385 = sbr.rel (%p383) target = $region36
      $region35: #{tpu_custom_call.1} parent=27 // pred_region
        _
      $region36: #{tpu_custom_call.1} parent=27 // pred_fallthru
        _
    $region28: #{tpu_custom_call.1} parent=5 // pred_fallthru
      _
    %p386 = scmp.le.s32.totalorder 2, %s8
    // Predicated region
    $region37: #{tpu_custom_call.1} parent=5 // pred_check
      %p387 = pneg %p386
    $region38: #{tpu_custom_call.1} parent=5 // pred_check_branch
      %389 = sbr.rel (%p387) target = $region40
    $region39: #{tpu_custom_call.1} parent=5 // pred_region
      %s390 = ssub.s32 %s8, 2
      // Predicated region
      $region41: #{tpu_custom_call.1} parent=39 // pred_check
        %p391 = pneg %p109
      $region42: #{tpu_custom_call.1} parent=39 // pred_check_branch
        %393 = sbr.rel (%p391) target = $region44
      $region43: #{tpu_custom_call.1} parent=39 // pred_region
        %p394 = scmp.lt.s32.totalorder %s19, 1
        %s395 = scalar_select %p394, %s19, 1
        %s396 = scalar_lea.vmem %s2, %s395
      $region44: #{tpu_custom_call.1} parent=39 // pred_fallthru
        _
    $region40: #{tpu_custom_call.1} parent=5 // pred_fallthru
      _
  $region6: #{tpu_custom_call.1} parent=0 // loop_footer
    %s12 = sadd.s32 1, %s8
  $region7: #{tpu_custom_call.1} parent=0 // loop_footer_branch
    %7 = sbr.rel target = $region3
  $region8: #{tpu_custom_call.1} parent=0 // loop_exit
    _

</llo_original>
